<compile_context>
chip_gen: v5e
topology: v5e:2x2
jax: 0.10.0
libtpu: 0.0.40
codegen_flags: <defaults>
</compile_context>

<pallas_src>
import math
import jax
import jax.numpy as jnp
from jax import lax
from jax.experimental import pallas as pl
from jax.experimental.pallas import tpu as pltpu

_MASK_VALUE = -1e30  # finite sentinel: keeps max()/exp() NaN-free on masked tiles


# --------------------------------------------------------------------------- #
# Pass 1: fused QKV projection — one (tp,H)@(H,3D) MXU pass per token tile.
# --------------------------------------------------------------------------- #
def _qkv_projection_kernel(x_ref, w_ref, b_ref, q_ref, k_ref, v_ref):
    D = q_ref.shape[-1]
    qkv = (jnp.dot(x_ref[0], w_ref[...], preferred_element_type=jnp.float32)
           + b_ref[...])
    q_ref[0] = qkv[:, :D].astype(q_ref.dtype)
    k_ref[0] = qkv[:, D:2 * D].astype(k_ref.dtype)
    v_ref[0] = qkv[:, 2 * D:].astype(v_ref.dtype)


# --------------------------------------------------------------------------- #
# Pass 2: flash attention over pre-projected q/k/v (online softmax).
# --------------------------------------------------------------------------- #
def _flash_attention_kernel(q_ref, k_ref, v_ref, o_ref, m_scr, l_scr, acc_scr):
    qi = pl.program_id(1)
    ki = pl.program_id(2)
    _, tq, D = q_ref.shape
    tk = k_ref.shape[1]

    @pl.when(ki == 0)
    def _init():
        m_scr[...] = jnp.full_like(m_scr, _MASK_VALUE)
        l_scr[...] = jnp.zeros_like(l_scr)
        acc_scr[...] = jnp.zeros_like(acc_scr)

    def _scores():
        # q @ k^T with contraction on k's last dim (no explicit XLU transpose).
        return lax.dot_general(q_ref[0], k_ref[0], (((1,), (1,)), ((), ())),
                               preferred_element_type=jnp.float32)  # (tq, tk)

    def _online_update(s):
        m_prev = m_scr[...]
        m_new = jnp.maximum(m_prev, jnp.max(s, axis=-1, keepdims=True))
        alpha = jnp.exp(m_prev - m_new)
        p = jnp.exp(s - m_new)
        l_scr[...] = alpha * l_scr[...] + jnp.sum(p, axis=-1, keepdims=True)
        # Cast p to v's dtype -> bf16 MXU when activations are bf16; acc is f32.
        acc_scr[...] = alpha * acc_scr[...] + jnp.dot(
            p.astype(v_ref.dtype), v_ref[0], preferred_element_type=jnp.float32)
        m_scr[...] = m_new

    row0 = qi * tq                       # first global query row of this tile
    col0 = ki * tk                       # first global key col of this tile
    needed = col0 <= row0 + (tq - 1)     # tile contributes at all (causal)
    full = col0 + (tk - 1) <= row0       # fully below diagonal: mask-free path

    @pl.when(jnp.logical_and(needed, full))
    def _full_tile():
        _online_update(_scores())

    @pl.when(jnp.logical_and(needed, jnp.logical_not(full)))
    def _diag_tile():
        s = _scores()
        # single-compare causal mask: col_g <= row_g  <=>  (c - r) <= row0 - col0
        diff = (lax.broadcasted_iota(jnp.int32, (tq, tk), 1)
                - lax.broadcasted_iota(jnp.int32, (tq, tk), 0))
        s = jnp.where(diff <= row0 - col0, s, _MASK_VALUE)
        _online_update(s)

    @pl.when(ki == pl.num_programs(2) - 1)
    def _finalize():
        l = l_scr[...]
        inv_l = pl.reciprocal(l, approx=True)   # EUP slot
        inv_l = inv_l * (2.0 - l * inv_l)       # one Newton step -> ~f32 exact
        # Post-softmax 1/sqrt(head_size) scale moved onto the (tq, D) output.
        scale = 1.0 / math.sqrt(D)
        o_ref[0] = (acc_scr[...] * (inv_l * scale)).astype(o_ref.dtype)


def single_head_attention(x, wq, wk, wv, bq, bk, bv, *, tq=256, tk=512):
    """x: (B, T, H); w*: (H, D); b*: (1, D). Returns (B, T, D)."""
    B, T, H = x.shape
    D = wq.shape[1]

    # Keep tq small enough that B*(T//tq) >= 2 so both v7x TensorCores get work
    # (B=2 in the demo, so any tq works); clamp tiles to T.
    tq = min(tq, T)
    tk = min(tk, T)
    if T % tq or T % tk:
        raise ValueError(f"seq_len {T} must be divisible by tile sizes ({tq}, {tk})")

    # ---- Pass 1: project q, k, v once per token (fused (H,3D) weight). ------
    # In a real model, concatenate the weights once at init time.
    w_qkv = jnp.concatenate([wq, wk, wv], axis=1)   # (H, 3D)
    b_qkv = jnp.concatenate([bq, bk, bv], axis=1)   # (1, 3D)

    tp = tq  # divides T by construction
    q, k, v = pl.pallas_call(
        _qkv_projection_kernel,
        out_shape=(jax.ShapeDtypeStruct((B, T, D), x.dtype),
                   jax.ShapeDtypeStruct((B, T, D), x.dtype),
                   jax.ShapeDtypeStruct((B, T, D), x.dtype)),
        grid_spec=pltpu.PrefetchScalarGridSpec(
            num_scalar_prefetch=0,
            grid=(B, T // tp),
            in_specs=[
                pl.BlockSpec((1, tp, H), lambda b, i: (b, i, 0)),   # x tile
                pl.BlockSpec((H, 3 * D), lambda b, i: (0, 0)),      # W_qkv
                pl.BlockSpec((1, 3 * D), lambda b, i: (0, 0)),      # b_qkv
            ],
            out_specs=[
                pl.BlockSpec((1, tp, D), lambda b, i: (b, i, 0)),
                pl.BlockSpec((1, tp, D), lambda b, i: (b, i, 0)),
                pl.BlockSpec((1, tp, D), lambda b, i: (b, i, 0)),
            ],
        ),
        compiler_params=pltpu.CompilerParams(
            dimension_semantics=("parallel", "parallel")),
    )(x, w_qkv, b_qkv)

    # ---- Pass 2: flash attention over the projected tensors. ----------------
    def kv_index_map(b, qi, ki):
        # Clamp to the last causally-needed kv block so upper-triangular
        # (skipped) steps re-use the resident block and issue NO DMA.
        return (b, jnp.minimum(ki, (qi * tq + tq - 1) // tk), 0)

    grid = (B, T // tq, T // tk)
    return pl.pallas_call(
        _flash_attention_kernel,
        out_shape=jax.ShapeDtypeStruct((B, T, D), x.dtype),
        grid_spec=pltpu.PrefetchScalarGridSpec(
            num_scalar_prefetch=0,
            grid=grid,
            in_specs=[
                pl.BlockSpec((1, tq, D), lambda b, qi, ki: (b, qi, 0)),  # q tile
                # If a v5e profile shows exposed kv DMA, add
                # pipeline_mode=pl.Buffered(3) to the two specs below.
                pl.BlockSpec((1, tk, D), kv_index_map),                  # k tile
                pl.BlockSpec((1, tk, D), kv_index_map),                  # v tile
            ],
            out_specs=pl.BlockSpec((1, tq, D), lambda b, qi, ki: (b, qi, 0)),
            scratch_shapes=[
                pltpu.VMEM((tq, 1), jnp.float32),    # running max m_i
                pltpu.VMEM((tq, 1), jnp.float32),    # running denom l_i
                pltpu.VMEM((tq, D), jnp.float32),    # output accumulator
            ],
        ),
        compiler_params=pltpu.CompilerParams(
            dimension_semantics=("parallel", "parallel", "arbitrary"),
            # Footprint at (tq,tk)=(256,512) is well under 32 MiB, which fits
            # the scoped-VMEM budget on v5e/v6e and v7x (64 MiB physical).
            vmem_limit_bytes=32 * 1024 * 1024,
        ),
    )(q, k, v)


def _reference(x, wq, wk, wv, bq, bk, bv):
    # pure-JAX reference mirroring the PyTorch forward
    q = x @ wq + bq[0]
    k = x @ wk + bk[0]
    v = x @ wv + bv[0]
    T = x.shape[1]
    D = q.shape[-1]
    scores = jnp.einsum("btd,bsd->bts", q, k)
    mask = jnp.tril(jnp.ones((T, T), dtype=bool))
    scores = jnp.where(mask[None], scores, -jnp.inf)
    w = jax.nn.softmax(scores, axis=-1) / math.sqrt(D)
    return jnp.einsum("bts,bsd->btd", w, v)


if __name__ == "__main__":
    B, H, D = 2, 32, 16   # batch, hidden_dim, head_size

    key = jax.random.PRNGKey(0)
    kx, kq, kk, kv, kbq, kbk, kbv = jax.random.split(key, 7)

    # deterministic "Linear" params, torch-like uniform(-1/sqrt(H), 1/sqrt(H))
    bound = 1.0 / math.sqrt(H)
    wq = jax.random.uniform(kq, (H, D), minval=-bound, maxval=bound, dtype=jnp.float32)
    wk = jax.random.uniform(kk, (H, D), minval=-bound, maxval=bound, dtype=jnp.float32)
    wv = jax.random.uniform(kv, (H, D), minval=-bound, maxval=bound, dtype=jnp.float32)
    bq = jax.random.uniform(kbq, (1, D), minval=-bound, maxval=bound, dtype=jnp.float32)
    bk = jax.random.uniform(kbk, (1, D), minval=-bound, maxval=bound, dtype=jnp.float32)
    bv = jax.random.uniform(kbv, (1, D), minval=-bound, maxval=bound, dtype=jnp.float32)

    # Case 1: multi-tile path (exercises online softmax + causal tile skip
    # + clamped kv DMA). With tq=128/tk=128 the grid has off-diagonal tiles.
    T1 = 256
    x1 = jax.random.normal(kx, (B, T1, H), dtype=jnp.float32)
    out1 = jax.block_until_ready(single_head_attention(x1, wq, wk, wv, bq, bk, bv,
                                                       tq=128, tk=128))
    ref1 = _reference(x1, wq, wk, wv, bq, bk, bv)
    assert out1.shape == (B, T1, D)
    assert jnp.allclose(out1, ref1, atol=2e-4, rtol=2e-4), "mismatch vs reference (T=256)"

    # Case 2: default (large) tiles, single tile per axis.
    out1b = jax.block_until_ready(single_head_attention(x1, wq, wk, wv, bq, bk, bv))
    assert jnp.allclose(out1b, ref1, atol=2e-4, rtol=2e-4), "mismatch vs reference (T=256, big tiles)"

    # Case 3: tiny block_size matching the module's toy config (single tile).
    T2 = 8
    x2 = jax.random.normal(kx, (B, T2, H), dtype=jnp.float32)
    out2 = jax.block_until_ready(single_head_attention(x2, wq, wk, wv, bq, bk, bv))
    ref2 = _reference(x2, wq, wk, wv, bq, bk, bv)
    assert out2.shape == (B, T2, D)
    assert jnp.allclose(out2, ref2, atol=2e-4, rtol=2e-4), "mismatch vs reference (T=8)"

    print("KERNEL_OK")
</pallas_src>

<mosaic_0001>
module attributes {stable_mosaic.version = 11 : i64} {
  func.func @_qkv_projection_kernel(%arg0: i32, %arg1: i32, %arg2: memref<1x128x32xf32, #tpu.memory_space<vmem>>, %arg3: memref<32x48xf32, #tpu.memory_space<vmem>>, %arg4: memref<1x48xf32, #tpu.memory_space<vmem>>, %arg5: memref<1x128x16xf32, #tpu.memory_space<vmem>>, %arg6: memref<1x128x16xf32, #tpu.memory_space<vmem>>, %arg7: memref<1x128x16xf32, #tpu.memory_space<vmem>>) attributes {dimension_semantics = [#tpu.dimension_semantics<parallel>, #tpu.dimension_semantics<parallel>], iteration_bounds = array<i64: 2, 2>, scalar_prefetch = 0 : i64, scratch_operands = 0 : i64, tpu.core_type = #tpu.core_type<tc>, window_params = [{transform_indices = @transform_0, window_bounds = array<i64: 1, 128, 32>}, {pipeline_mode = #tpu.pipeline_mode<synchronous>, transform_indices = @transform_1, window_bounds = array<i64: 32, 48>}, {pipeline_mode = #tpu.pipeline_mode<synchronous>, transform_indices = @transform_2, window_bounds = array<i64: 1, 48>}, {transform_indices = @transform_3, window_bounds = array<i64: 1, 128, 16>}, {transform_indices = @transform_4, window_bounds = array<i64: 1, 128, 16>}, {transform_indices = @transform_5, window_bounds = array<i64: 1, 128, 16>}]} {
    %c0 = arith.constant 0 : index
    %c0_0 = arith.constant 0 : index
    %c0_1 = arith.constant 0 : index
    %0 = vector.load %arg2[%c0, %c0_0, %c0_1] : memref<1x128x32xf32, #tpu.memory_space<vmem>>, vector<1x128x32xf32>
    %1 = vector.shape_cast %0 : vector<1x128x32xf32> to vector<128x32xf32>
    %c0_2 = arith.constant 0 : index
    %c0_3 = arith.constant 0 : index
    %2 = vector.load %arg3[%c0_2, %c0_3] : memref<32x48xf32, #tpu.memory_space<vmem>>, vector<32x48xf32>
    %cst = arith.constant dense<0.000000e+00> : vector<128x48xf32>
    %3 = tpu.matmul %1, %2, %cst {dimension_numbers = #tpu.dot_dimension_numbers<[1], [0], [0], [1], [0, 0, 1, 1], [], []>} : vector<128x32xf32>, vector<32x48xf32>, vector<128x48xf32> -> vector<128x48xf32>
    %c0_4 = arith.constant 0 : index
    %c0_5 = arith.constant 0 : index
    %4 = vector.load %arg4[%c0_4, %c0_5] : memref<1x48xf32, #tpu.memory_space<vmem>>, vector<1x48xf32>
    %5 = vector.broadcast %4 : vector<1x48xf32> to vector<128x48xf32>
    %6 = arith.addf %3, %5 : vector<128x48xf32>
    %7 = vector.extract_strided_slice %6 {offsets = [0, 0], sizes = [128, 16], strides = [1, 1]} : vector<128x48xf32> to vector<128x16xf32>
    %c0_6 = arith.constant 0 : index
    %c0_7 = arith.constant 0 : index
    %c0_8 = arith.constant 0 : index
    %8 = vector.load %arg5[%c0_6, %c0_7, %c0_8] : memref<1x128x16xf32, #tpu.memory_space<vmem>>, vector<1x128x16xf32>
    %9 = vector.shape_cast %8 : vector<1x128x16xf32> to vector<128x16xf32>
    %10 = vector.shape_cast %7 : vector<128x16xf32> to vector<1x128x16xf32>
    tpu.vector_store %arg5[%c0_6, %c0_7, %c0_8], %10 {strides = array<i32>} : memref<1x128x16xf32, #tpu.memory_space<vmem>>, vector<1x128x16xf32>,
    %11 = vector.extract_strided_slice %6 {offsets = [0, 16], sizes = [128, 16], strides = [1, 1]} : vector<128x48xf32> to vector<128x16xf32>
    %c0_9 = arith.constant 0 : index
    %c0_10 = arith.constant 0 : index
    %c0_11 = arith.constant 0 : index
    %12 = vector.load %arg6[%c0_9, %c0_10, %c0_11] : memref<1x128x16xf32, #tpu.memory_space<vmem>>, vector<1x128x16xf32>
    %13 = vector.shape_cast %12 : vector<1x128x16xf32> to vector<128x16xf32>
    %14 = vector.shape_cast %11 : vector<128x16xf32> to vector<1x128x16xf32>
    tpu.vector_store %arg6[%c0_9, %c0_10, %c0_11], %14 {strides = array<i32>} : memref<1x128x16xf32, #tpu.memory_space<vmem>>, vector<1x128x16xf32>,
    %15 = vector.extract_strided_slice %6 {offsets = [0, 32], sizes = [128, 16], strides = [1, 1]} : vector<128x48xf32> to vector<128x16xf32>
    %c0_12 = arith.constant 0 : index
    %c0_13 = arith.constant 0 : index
    %c0_14 = arith.constant 0 : index
    %16 = vector.load %arg7[%c0_12, %c0_13, %c0_14] : memref<1x128x16xf32, #tpu.memory_space<vmem>>, vector<1x128x16xf32>
    %17 = vector.shape_cast %16 : vector<1x128x16xf32> to vector<128x16xf32>
    %18 = vector.shape_cast %15 : vector<128x16xf32> to vector<1x128x16xf32>
    tpu.vector_store %arg7[%c0_12, %c0_13, %c0_14], %18 {strides = array<i32>} : memref<1x128x16xf32, #tpu.memory_space<vmem>>, vector<1x128x16xf32>,
    return
  }
  func.func @transform_0(%arg0: i32, %arg1: i32) -> (i32, i32, i32) {
    %c0_i32 = arith.constant 0 : i32
    %c0_i32_0 = arith.constant 0 : i32
    return %arg0, %arg1, %c0_i32 : i32, i32, i32
  }
  func.func @transform_1(%arg0: i32, %arg1: i32) -> (i32, i32) {
    %c0_i32 = arith.constant 0 : i32
    %c0_i32_0 = arith.constant 0 : i32
    %c0_i32_1 = arith.constant 0 : i32
    return %c0_i32, %c0_i32_0 : i32, i32
  }
  func.func @transform_2(%arg0: i32, %arg1: i32) -> (i32, i32) {
    %c0_i32 = arith.constant 0 : i32
    %c0_i32_0 = arith.constant 0 : i32
    %c0_i32_1 = arith.constant 0 : i32
    return %c0_i32, %c0_i32_0 : i32, i32
  }
  func.func @transform_3(%arg0: i32, %arg1: i32) -> (i32, i32, i32) {
    %c0_i32 = arith.constant 0 : i32
    %c0_i32_0 = arith.constant 0 : i32
    return %arg0, %arg1, %c0_i32 : i32, i32, i32
  }
  func.func @transform_4(%arg0: i32, %arg1: i32) -> (i32, i32, i32) {
    %c0_i32 = arith.constant 0 : i32
    %c0_i32_0 = arith.constant 0 : i32
    return %arg0, %arg1, %c0_i32 : i32, i32, i32
  }
  func.func @transform_5(%arg0: i32, %arg1: i32) -> (i32, i32, i32) {
    %c0_i32 = arith.constant 0 : i32
    %c0_i32_0 = arith.constant 0 : i32
    return %arg0, %arg1, %c0_i32 : i32, i32, i32
  }
}

</mosaic_0001>

<llo_original>
// kernel: tpu_custom_call.1
$region0: #{tpu_custom_call.1}
  #allocation0 [shape = 'u32[]', space=smem, size = 0x4, offset = 0x4, fixed_abs, tag = 'smem constant byte address 0x4 - core index']
  #allocation1 [shape = 'u32[72,128]{1,0:T(1,128)}', space=vmem, size = 0x9000, scoped, tag = 'internal scratch']
  %s0 = inlined_call_operand.vmem [shape: f32[2,256,32], index: 0, kind: input, shape index: {}]
  %s1 = inlined_call_operand.vmem [shape: f32[32,48], index: 1, kind: input, shape index: {}]
  %s2 = inlined_call_operand.vmem [shape: f32[1,48], index: 2, kind: input, shape index: {}]
  %s3 = inlined_call_operand.vmem [shape: f32[2,256,16], index: 3, kind: output, shape index: {0}]
  %s4 = inlined_call_operand.vmem [shape: f32[2,256,16], index: 4, kind: output, shape index: {1}]
  %s5 = inlined_call_operand.vmem [shape: f32[2,256,16], index: 5, kind: output, shape index: {2}]
  %6 = xla_tuple %s3, %s4, %s5
  %s7 = sld [smem:[#allocation0]]
  $region61: #{tpu_custom_call.1} parent=0
    _
  %s9 = ssub.s32 1, %s7
  %s10 = scalar_select 0, %s9, %s7
  loop: start=0, step=1, limit=6
  $region2: #{tpu_custom_call.1} parent=0 // loop_pre_header
    _
  $region3: #{tpu_custom_call.1} parent=0 // loop_header
    %s12 = sphi 0, %s16
    %p13 = scmp.ge.s32.totalorder %s12, 6
    %s19 = sphi 0, %s31
    %s20 = sphi 0, %s27
    %s21 = sphi 0, %s19
    %s22 = sphi 0, %s20
    %s23 = sphi 0, %s21
    %s24 = sphi 0, %s22
    %s36 = sphi 0, %s38
    %s39 = sphi 0, %s36
    %s40 = sphi 0, %s39
    %s56 = sphi 0, %s40
    %s60 = sphi 0, %s60
    %s62 = sphi 0, %s60
    %s63 = sphi 0, %s62
    %s77 = sphi 0, %s63
    %s81 = sphi 0, %s81
    %s83 = sphi 0, %s81
    %s84 = sphi 0, %s83
    %s98 = sphi 0, %s84
    %s106 = sphi 0, %s108
    %s109 = sphi 0, %s106
    %s110 = sphi 0, %s109
    %s126 = sphi 0, %s110
    %s134 = sphi 0, %s136
    %s137 = sphi 0, %s134
    %s138 = sphi 0, %s137
    %s154 = sphi 0, %s138
    %s162 = sphi 0, %s164
    %s165 = sphi 0, %s162
    %s166 = sphi 0, %s165
    %s182 = sphi 0, %s166
  $region4: #{tpu_custom_call.1} parent=0 // loop_header_branch
    %15 = sbr.rel (%p13) target = $region8
  $region5: #{tpu_custom_call.1} parent=0 // loop_body
    %s17 = ssub.s32 %s12, 1
    %s18 = ssub.s32 %s12, 2
    %s25 = sadd.s32 1, %s20
    %p26 = scmp.ge.s32.totalorder %s25, 2
    %s27 = scalar_select %p26, 0, %s25
    %s28 = sadd.s32 1, %s19
    %s29 = scalar_select %p26, %s28, %s19
    %p30 = scmp.ge.s32.totalorder %s29, 2
    %s31 = scalar_select %p30, 0, %s29
    %s32 = ssub.s32 %s19, %s31
    %s33 = ssub.s32 %s20, %s27
    %s34 = sor.u32 %s32, %s33
    %p35 = scmp.eq.s32.totalorder %s34, 0
    %s37 = sadd.s32 %s36, 1
    %s38 = scalar_select %p35, %s36, %s37
    %p41 = pneg %p35
    %p42 = scmp.eq.s32.totalorder %s12, 3
    %p43 = por %p41, %p42
    %p44 = scmp.ne.s32.totalorder %s36, %s39
    %p45 = scmp.eq.s32.totalorder %s12, 0
    %p46 = por %p44, %p45
    %p47 = scmp.ne.s32.totalorder %s36, %s39
    %p48 = scmp.eq.s32.totalorder %s17, 3
    %p49 = por %p47, %p48
    %p50 = scmp.ne.s32.totalorder %s39, %s40
    %p51 = scmp.eq.s32.totalorder %s17, 0
    %p52 = por %p50, %p51
    %p53 = scmp.ne.s32.totalorder %s39, %s40
    %p54 = scmp.eq.s32.totalorder %s18, 3
    %p55 = por %p53, %p54
    %p57 = scmp.ne.s32.totalorder %s40, %s56
    %p58 = scmp.eq.s32.totalorder %s18, 0
    %p59 = por %p57, %p58
    %s61 = sadd.s32 %s60, 1
    %p64 = scmp.eq.s32.totalorder %s12, 3
    %p65 = scmp.ne.s32.totalorder %s60, %s62
    %p66 = scmp.eq.s32.totalorder %s12, 0
    %p67 = por %p65, %p66
    %p68 = scmp.ne.s32.totalorder %s60, %s62
    %p69 = scmp.eq.s32.totalorder %s17, 3
    %p70 = por %p68, %p69
    %p71 = scmp.ne.s32.totalorder %s62, %s63
    %p72 = scmp.eq.s32.totalorder %s17, 0
    %p73 = por %p71, %p72
    %p74 = scmp.ne.s32.totalorder %s62, %s63
    %p75 = scmp.eq.s32.totalorder %s18, 3
    %p76 = por %p74, %p75
    %p78 = scmp.ne.s32.totalorder %s63, %s77
    %p79 = scmp.eq.s32.totalorder %s18, 0
    %p80 = por %p78, %p79
    %s82 = sadd.s32 %s81, 1
    %p85 = scmp.eq.s32.totalorder %s12, 3
    %p86 = scmp.ne.s32.totalorder %s81, %s83
    %p87 = scmp.eq.s32.totalorder %s12, 0
    %p88 = por %p86, %p87
    %p89 = scmp.ne.s32.totalorder %s81, %s83
    %p90 = scmp.eq.s32.totalorder %s17, 3
    %p91 = por %p89, %p90
    %p92 = scmp.ne.s32.totalorder %s83, %s84
    %p93 = scmp.eq.s32.totalorder %s17, 0
    %p94 = por %p92, %p93
    %p95 = scmp.ne.s32.totalorder %s83, %s84
    %p96 = scmp.eq.s32.totalorder %s18, 3
    %p97 = por %p95, %p96
    %p99 = scmp.ne.s32.totalorder %s84, %s98
    %p100 = scmp.eq.s32.totalorder %s18, 0
    %p101 = por %p99, %p100
    %s102 = ssub.s32 %s19, %s31
    %s103 = ssub.s32 %s20, %s27
    %s104 = sor.u32 %s102, %s103
    %p105 = scmp.eq.s32.totalorder %s104, 0
    %s107 = sadd.s32 %s106, 1
    %s108 = scalar_select %p105, %s106, %s107
    %p111 = pneg %p105
    %p112 = scmp.eq.s32.totalorder %s12, 3
    %p113 = por %p111, %p112
    %p114 = scmp.ne.s32.totalorder %s106, %s109
    %p115 = scmp.eq.s32.totalorder %s12, 0
    %p116 = por %p114, %p115
    %p117 = scmp.ne.s32.totalorder %s106, %s109
    %p118 = scmp.eq.s32.totalorder %s17, 3
    %p119 = por %p117, %p118
    %p120 = scmp.ne.s32.totalorder %s109, %s110
    %p121 = scmp.eq.s32.totalorder %s17, 0
    %p122 = por %p120, %p121
    %p123 = scmp.ne.s32.totalorder %s109, %s110
    %p124 = scmp.eq.s32.totalorder %s18, 3
    %p125 = por %p123, %p124
    %p127 = scmp.ne.s32.totalorder %s110, %s126
    %p128 = scmp.eq.s32.totalorder %s18, 0
    %p129 = por %p127, %p128
    %s130 = ssub.s32 %s19, %s31
    %s131 = ssub.s32 %s20, %s27
    %s132 = sor.u32 %s130, %s131
    %p133 = scmp.eq.s32.totalorder %s132, 0
    %s135 = sadd.s32 %s134, 1
    %s136 = scalar_select %p133, %s134, %s135
    %p139 = pneg %p133
    %p140 = scmp.eq.s32.totalorder %s12, 3
    %p141 = por %p139, %p140
    %p142 = scmp.ne.s32.totalorder %s134, %s137
    %p143 = scmp.eq.s32.totalorder %s12, 0
    %p144 = por %p142, %p143
    %p145 = scmp.ne.s32.totalorder %s134, %s137
    %p146 = scmp.eq.s32.totalorder %s17, 3
    %p147 = por %p145, %p146
    %p148 = scmp.ne.s32.totalorder %s137, %s138
    %p149 = scmp.eq.s32.totalorder %s17, 0
    %p150 = por %p148, %p149
    %p151 = scmp.ne.s32.totalorder %s137, %s138
    %p152 = scmp.eq.s32.totalorder %s18, 3
    %p153 = por %p151, %p152
    %p155 = scmp.ne.s32.totalorder %s138, %s154
    %p156 = scmp.eq.s32.totalorder %s18, 0
    %p157 = por %p155, %p156
    %s158 = ssub.s32 %s19, %s31
    %s159 = ssub.s32 %s20, %s27
    %s160 = sor.u32 %s158, %s159
    %p161 = scmp.eq.s32.totalorder %s160, 0
    %s163 = sadd.s32 %s162, 1
    %s164 = scalar_select %p161, %s162, %s163
    %p167 = pneg %p161
    %p168 = scmp.eq.s32.totalorder %s12, 3
    %p169 = por %p167, %p168
    %p170 = scmp.ne.s32.totalorder %s162, %s165
    %p171 = scmp.eq.s32.totalorder %s12, 0
    %p172 = por %p170, %p171
    %p173 = scmp.ne.s32.totalorder %s162, %s165
    %p174 = scmp.eq.s32.totalorder %s17, 3
    %p175 = por %p173, %p174
    %p176 = scmp.ne.s32.totalorder %s165, %s166
    %p177 = scmp.eq.s32.totalorder %s17, 0
    %p178 = por %p176, %p177
    %p179 = scmp.ne.s32.totalorder %s165, %s166
    %p180 = scmp.eq.s32.totalorder %s18, 3
    %p181 = por %p179, %p180
    %p183 = scmp.ne.s32.totalorder %s166, %s182
    %p184 = scmp.eq.s32.totalorder %s18, 0
    %p185 = por %p183, %p184
    %p186 = scmp.le.s32.totalorder 1, %s12
    %p187 = scmp.lt.s32.totalorder %s12, 5
    %p188 = pnand %p186, %p187
    %p189 = pneg %p188
    // Predicated region
    $region9: #{tpu_custom_call.1} parent=5 // pred_check
      _
    $region10: #{tpu_custom_call.1} parent=5 // pred_check_branch
      %191 = sbr.rel (%p188) target = $region12
    $region11: #{tpu_custom_call.1} parent=5 // pred_region
      %s192 = ssub.s32 %s12, 1
      // Predicated region
      $region13: #{tpu_custom_call.1} parent=11 // pred_check
        %p193 = pneg %p73
      $region14: #{tpu_custom_call.1} parent=11 // pred_check_branch
        %195 = sbr.rel (%p193) target = $region16
      $region15: #{tpu_custom_call.1} parent=11 // pred_region
        _
      $region16: #{tpu_custom_call.1} parent=11 // pred_fallthru
        _
      // Predicated region
      $region17: #{tpu_custom_call.1} parent=11 // pred_check
        %p196 = pneg %p94
      $region18: #{tpu_custom_call.1} parent=11 // pred_check_branch
        %198 = sbr.rel (%p196) target = $region20
      $region19: #{tpu_custom_call.1} parent=11 // pred_region
        _
      $region20: #{tpu_custom_call.1} parent=11 // pred_fallthru
        _
    $region12: #{tpu_custom_call.1} parent=5 // pred_fallthru
      _
    %p199 = scmp.lt.s32.totalorder %s12, 4
    // Predicated region
    $region21: #{tpu_custom_call.1} parent=5 // pred_check
      %p200 = pneg %p199
    $region22: #{tpu_custom_call.1} parent=5 // pred_check_branch
      %202 = sbr.rel (%p200) target = $region24
    $region23: #{tpu_custom_call.1} parent=5 // pred_region
      // Predicated region
      $region25: #{tpu_custom_call.1} parent=23 // pred_check
        %p203 = pneg %p46
      $region26: #{tpu_custom_call.1} parent=23 // pred_check_branch
        %205 = sbr.rel (%p203) target = $region28
      $region27: #{tpu_custom_call.1} parent=23 // pred_region
        %s206 = smul.u32 16, %s20
        %p207 = scmp.lt.s32.totalorder %s19, 1
        %s208 = scalar_select %p207, %s19, 1
        %p209 = scmp.lt.s32.totalorder %s206, 31
        %s210 = scalar_select %p209, %s206, 31
        %s211 = smul.addr %s208, 32
        %s212 = sadd.s32 %s210, %s211
        %s213 = smul.addr %s212, 8
        %s214 = scalar_lea.vmem %s0, %s213
        %s215 = smul.u32 16, %s20
      $region28: #{tpu_custom_call.1} parent=23 // pred_fallthru
        _
    $region24: #{tpu_custom_call.1} parent=5 // pred_fallthru
      _
    %p216 = scmp.le.s32.totalorder 1, %s12
    %p217 = scmp.lt.s32.totalorder %s12, 5
    %p218 = pnand %p216, %p217
    %p219 = pneg %p218
    // Predicated region
    $region29: #{tpu_custom_call.1} parent=5 // pred_check
      _
    $region30: #{tpu_custom_call.1} parent=5 // pred_check_branch
      %221 = sbr.rel (%p218) target = $region32
    $region31: #{tpu_custom_call.1} parent=5 // pred_region
      %s222 = ssub.s32 %s12, 1
      %s223 = smul.u32 16, %s22
      %p224 = scmp.lt.s32.totalorder %s21, 1
      %s225 = scalar_select %p224, %s21, 1
      %p226 = scmp.lt.s32.totalorder %s223, 31
      %s227 = scalar_select %p226, %s223, 31
      %s228 = smul.addr %s225, 32
      %s229 = sadd.s32 %s227, %s228
      %s230 = smul.addr %s229, 8
      %s231 = scalar_lea.vmem %s0, %s230
      %p232 = pneg %p52
      %p233 = pneg %p49
      %p234 = pneg %p73
      %p235 = pneg %p70
      %p236 = pneg %p94
      %p237 = pneg %p91
      %p238 = pneg %p122
      %p239 = pneg %p119
      %s240 = smul.u32 16, %s22
      %p241 = scmp.lt.s32.totalorder %s21, 1
      %s242 = scalar_select %p241, %s21, 1
      %p243 = scmp.lt.s32.totalorder %s240, 31
      %s244 = scalar_select %p243, %s240, 31
      %s245 = smul.addr %s242, 32
      %s246 = sadd.s32 %s244, %s245
      %s247 = smul.addr %s246, 8
      %s248 = scalar_lea.vmem %s3, %s247
      %p249 = pneg %p150
      %p250 = pneg %p147
      %s251 = smul.u32 16, %s22
      %p252 = scmp.lt.s32.totalorder %s21, 1
      %s253 = scalar_select %p252, %s21, 1
      %p254 = scmp.lt.s32.totalorder %s251, 31
      %s255 = scalar_select %p254, %s251, 31
      %s256 = smul.addr %s253, 32
      %s257 = sadd.s32 %s255, %s256
      %s258 = smul.addr %s257, 8
      %s259 = scalar_lea.vmem %s4, %s258
      %p260 = pneg %p178
      %p261 = pneg %p175
      %s262 = smul.u32 16, %s22
      %p263 = scmp.lt.s32.totalorder %s21, 1
      %s264 = scalar_select %p263, %s21, 1
      %p265 = scmp.lt.s32.totalorder %s262, 31
      %s266 = scalar_select %p265, %s262, 31
      %s267 = smul.addr %s264, 32
      %s268 = sadd.s32 %s266, %s267
      %s269 = smul.addr %s268, 8
      %s270 = scalar_lea.vmem %s5, %s269
      %s271 = smul.u32 16, %s22
      %p272 = scmp.lt.s32.totalorder %s21, 1
      %s273 = scalar_select %p272, %s21, 1
      %p274 = scmp.lt.s32.totalorder %s271, 31
      %s275 = scalar_select %p274, %s271, 31
      %s276 = smul.addr %s273, 32
      %s277 = sadd.s32 %s275, %s276
      %s278 = smul.addr %s277, 8
      %s279 = scalar_lea.vmem %s0, %s278
      %s280 = smul.u32 16, %s22
      %s281 = smul.u32 16, %s22
      %p282 = scmp.lt.s32.totalorder %s21, 1
      %s283 = scalar_select %p282, %s21, 1
      %p284 = scmp.lt.s32.totalorder %s281, 31
      %s285 = scalar_select %p284, %s281, 31
      %s286 = smul.addr %s283, 32
      %s287 = sadd.s32 %s285, %s286
      %s288 = smul.addr %s287, 8
      %s289 = scalar_lea.vmem %s3, %s288
      %s290 = smul.u32 16, %s22
      %s291 = smul.u32 16, %s22
      %p292 = scmp.lt.s32.totalorder %s21, 1
      %s293 = scalar_select %p292, %s21, 1
      %p294 = scmp.lt.s32.totalorder %s291, 31
      %s295 = scalar_select %p294, %s291, 31
      %s296 = smul.addr %s293, 32
      %s297 = sadd.s32 %s295, %s296
      %s298 = smul.addr %s297, 8
      %s299 = scalar_lea.vmem %s4, %s298
      %s300 = smul.u32 16, %s22
      %s301 = smul.u32 16, %s22
      %p302 = scmp.lt.s32.totalorder %s21, 1
      %s303 = scalar_select %p302, %s21, 1
      %p304 = scmp.lt.s32.totalorder %s301, 31
      %s305 = scalar_select %p304, %s301, 31
      %s306 = smul.addr %s303, 32
      %s307 = sadd.s32 %s305, %s306
      %s308 = smul.addr %s307, 8
      %s309 = scalar_lea.vmem %s5, %s308
      %s310 = smul.u32 16, %s22
      %v311 = vld [vmem:[%s279] sm:$0xff]
      %v312 = vld [vmem:[%s279 + $0x8] sm:$0xff]
      %v313 = vld [vmem:[%s279 + $0x10] sm:$0xff]
      %v314 = vld [vmem:[%s279 + $0x18] sm:$0xff]
      %v315 = vld [vmem:[%s279 + $0x20] sm:$0xff]
      %v316 = vld [vmem:[%s279 + $0x28] sm:$0xff]
      %v317 = vld [vmem:[%s279 + $0x30] sm:$0xff]
      %v318 = vld [vmem:[%s279 + $0x38] sm:$0xff]
      %v319 = vld [vmem:[%s279 + $0x40] sm:$0xff]
      %v320 = vld [vmem:[%s279 + $0x48] sm:$0xff]
      %v321 = vld [vmem:[%s279 + $0x50] sm:$0xff]
      %v322 = vld [vmem:[%s279 + $0x58] sm:$0xff]
      %v323 = vld [vmem:[%s279 + $0x60] sm:$0xff]
      %v324 = vld [vmem:[%s279 + $0x68] sm:$0xff]
      %v325 = vld [vmem:[%s279 + $0x70] sm:$0xff]
      %v326 = vld [vmem:[%s279 + $0x78] sm:$0xff]
      %v327 = vld [vmem:[%s1] sm:$0xff]
      %v328 = vld [vmem:[%s1 + $0x8] sm:$0xff]
      %v329 = vld [vmem:[%s1 + $0x10] sm:$0xff]
      %v330 = vld [vmem:[%s1 + $0x18] sm:$0xff]
      %v331 = vld [vmem:[%s2] sm:$0x1]
      %v333 = vperm.slane %v331, 0
      %vm335 = vcmask 261120
      %v337 = vsel %vm335, %v311, 0
      %v340 = vsel %vm335, %v312, 0
      %v343 = vsel %vm335, %v313, 0
      %v346 = vsel %vm335, %v314, 0
      %v349 = vsel %vm335, %v315, 0
      %v352 = vsel %vm335, %v316, 0
      %v355 = vsel %vm335, %v317, 0
      %v358 = vsel %vm335, %v318, 0
      %v361 = vsel %vm335, %v319, 0
      %v364 = vsel %vm335, %v320, 0
      %v367 = vsel %vm335, %v321, 0
      %v370 = vsel %vm335, %v322, 0
      %v373 = vsel %vm335, %v323, 0
      %v376 = vsel %vm335, %v324, 0
      %v379 = vsel %vm335, %v325, 0
      %v382 = vsel %vm335, %v326, 0
      %384 = vmatpush.msra.mxu0 0.0
      %385 = vmatpush.msra.mxu0 0.0
      %386 = vmatpush.msra.mxu0 0.0
      %387 = vmatpush.msra.mxu0 0.0
      %388 = vmatpush.msra.mxu0 0.0
      %389 = vmatpush.msra.mxu0 0.0
      %390 = vmatpush.msra.mxu0 0.0
      %391 = vmatpush.msra.mxu0 0.0
      %392 = vmatpush.msra.mxu0 0.0
      %393 = vmatpush.msra.mxu0 0.0
      %394 = vmatpush.msra.mxu0 0.0
      %395 = vmatpush.msra.mxu0 0.0
      %396 = vmatpush.msra.mxu0 %v330
      %397 = vmatpush.msra.mxu0 %v329
      %398 = vmatpush.msra.mxu0 %v328
      %399 = vmatpush.msra.mxu0 %v327
      %400 = vmatmul.f32.gmra.mxu0 %v337
      %v401 = vpop.f32.mrf.mxu0
      %v402 = vadd.f32 %v333, %v401
      %403 = vmatmul.f32.gmra.mxu0 %v340
      %v404 = vpop.f32.mrf.mxu0
      %v405 = vadd.f32 %v333, %v404
      %406 = vmatmul.f32.gmra.mxu0 %v343
      %v407 = vpop.f32.mrf.mxu0
      %v408 = vadd.f32 %v333, %v407
      %409 = vmatmul.f32.gmra.mxu0 %v346
      %v410 = vpop.f32.mrf.mxu0
      %v411 = vadd.f32 %v333, %v410
      %412 = vmatmul.f32.gmra.mxu0 %v349
      %v413 = vpop.f32.mrf.mxu0
      %v414 = vadd.f32 %v333, %v413
      %415 = vmatmul.f32.gmra.mxu0 %v352
      %v416 = vpop.f32.mrf.mxu0
      %v417 = vadd.f32 %v333, %v416
      %418 = vmatmul.f32.gmra.mxu0 %v355
      %v419 = vpop.f32.mrf.mxu0
      %v420 = vadd.f32 %v333, %v419
      %421 = vmatmul.f32.gmra.mxu0 %v358
      %v422 = vpop.f32.mrf.mxu0
      %v423 = vadd.f32 %v333, %v422
      %424 = vmatmul.f32.gmra.mxu0 %v361
      %v425 = vpop.f32.mrf.mxu0
      %v426 = vadd.f32 %v333, %v425
      %427 = vmatmul.f32.gmra.mxu0 %v364
      %v428 = vpop.f32.mrf.mxu0
      %v429 = vadd.f32 %v333, %v428
      %430 = vmatmul.f32.gmra.mxu0 %v367
      %v431 = vpop.f32.mrf.mxu0
      %v432 = vadd.f32 %v333, %v431
      %433 = vmatmul.f32.gmra.mxu0 %v370
      %v434 = vpop.f32.mrf.mxu0
      %v435 = vadd.f32 %v333, %v434
      %436 = vmatmul.f32.gmra.mxu0 %v373
      %v437 = vpop.f32.mrf.mxu0
      %v438 = vadd.f32 %v333, %v437
      %439 = vmatmul.f32.gmra.mxu0 %v376
      %v440 = vpop.f32.mrf.mxu0
      %v441 = vadd.f32 %v333, %v440
      %442 = vmatmul.f32.gmra.mxu0 %v379
      %v443 = vpop.f32.mrf.mxu0
      %v444 = vadd.f32 %v333, %v443
      %445 = vmatmul.f32.gmra.mxu0 %v382
      %v446 = vpop.f32.mrf.mxu0
      %v447 = vadd.f32 %v333, %v446
      %448 = vdwg.mxu0
      %vm449 = vcmask 130048
      %450 = vst.msk [vmem:[%s289] sm:$0xff] %vm449, %v402
      %451 = vst.msk [vmem:[%s289 + $0x8] sm:$0xff] %vm449, %v405
      %452 = vst.msk [vmem:[%s289 + $0x10] sm:$0xff] %vm449, %v408
      %453 = vst.msk [vmem:[%s289 + $0x18] sm:$0xff] %vm449, %v411
      %454 = vst.msk [vmem:[%s289 + $0x20] sm:$0xff] %vm449, %v414
      %455 = vst.msk [vmem:[%s289 + $0x28] sm:$0xff] %vm449, %v417
      %456 = vst.msk [vmem:[%s289 + $0x30] sm:$0xff] %vm449, %v420
      %457 = vst.msk [vmem:[%s289 + $0x38] sm:$0xff] %vm449, %v423
      %458 = vst.msk [vmem:[%s289 + $0x40] sm:$0xff] %vm449, %v426
      %459 = vst.msk [vmem:[%s289 + $0x48] sm:$0xff] %vm449, %v429
      %460 = vst.msk [vmem:[%s289 + $0x50] sm:$0xff] %vm449, %v432
      %461 = vst.msk [vmem:[%s289 + $0x58] sm:$0xff] %vm449, %v435
      %462 = vst.msk [vmem:[%s289 + $0x60] sm:$0xff] %vm449, %v438
      %463 = vst.msk [vmem:[%s289 + $0x68] sm:$0xff] %vm449, %v441
      %464 = vst.msk [vmem:[%s289 + $0x70] sm:$0xff] %vm449, %v444
      %465 = vst.msk [vmem:[%s289 + $0x78] sm:$0xff] %vm449, %v447
      %482 = vrot.lane.b32.xlu0 %v402, 112
      %v483 = vpop.permute.xlu0 %482
      %484 = vrot.lane.b32.xlu0 %v405, 112
      %v485 = vpop.permute.xlu0 %484
      %486 = vrot.lane.b32.xlu0 %v408, 112
      %v487 = vpop.permute.xlu0 %486
      %488 = vrot.lane.b32.xlu0 %v411, 112
      %v489 = vpop.permute.xlu0 %488
      %490 = vrot.lane.b32.xlu0 %v414, 112
      %v491 = vpop.permute.xlu0 %490
      %492 = vrot.lane.b32.xlu0 %v417, 112
      %v493 = vpop.permute.xlu0 %492
      %494 = vrot.lane.b32.xlu0 %v420, 112
      %v495 = vpop.permute.xlu0 %494
      %496 = vrot.lane.b32.xlu0 %v423, 112
      %v497 = vpop.permute.xlu0 %496
      %498 = vrot.lane.b32.xlu0 %v426, 112
      %v499 = vpop.permute.xlu0 %498
      %500 = vrot.lane.b32.xlu0 %v429, 112
      %v501 = vpop.permute.xlu0 %500
      %502 = vrot.lane.b32.xlu0 %v432, 112
      %v503 = vpop.permute.xlu0 %502
      %504 = vrot.lane.b32.xlu0 %v435, 112
      %v505 = vpop.permute.xlu0 %504
      %506 = vrot.lane.b32.xlu0 %v438, 112
      %v507 = vpop.permute.xlu0 %506
      %508 = vrot.lane.b32.xlu0 %v441, 112
      %v509 = vpop.permute.xlu0 %508
      %510 = vrot.lane.b32.xlu0 %v444, 112
      %v511 = vpop.permute.xlu0 %510
      %512 = vrot.lane.b32.xlu0 %v447, 112
      %v513 = vpop.permute.xlu0 %512
      %530 = vst.msk [vmem:[%s299] sm:$0xff] %vm449, %v483
      %531 = vst.msk [vmem:[%s299 + $0x8] sm:$0xff] %vm449, %v485
      %532 = vst.msk [vmem:[%s299 + $0x10] sm:$0xff] %vm449, %v487
      %533 = vst.msk [vmem:[%s299 + $0x18] sm:$0xff] %vm449, %v489
      %534 = vst.msk [vmem:[%s299 + $0x20] sm:$0xff] %vm449, %v491
      %535 = vst.msk [vmem:[%s299 + $0x28] sm:$0xff] %vm449, %v493
      %536 = vst.msk [vmem:[%s299 + $0x30] sm:$0xff] %vm449, %v495
      %537 = vst.msk [vmem:[%s299 + $0x38] sm:$0xff] %vm449, %v497
      %538 = vst.msk [vmem:[%s299 + $0x40] sm:$0xff] %vm449, %v499
      %539 = vst.msk [vmem:[%s299 + $0x48] sm:$0xff] %vm449, %v501
      %540 = vst.msk [vmem:[%s299 + $0x50] sm:$0xff] %vm449, %v503
      %541 = vst.msk [vmem:[%s299 + $0x58] sm:$0xff] %vm449, %v505
      %542 = vst.msk [vmem:[%s299 + $0x60] sm:$0xff] %vm449, %v507
      %543 = vst.msk [vmem:[%s299 + $0x68] sm:$0xff] %vm449, %v509
      %544 = vst.msk [vmem:[%s299 + $0x70] sm:$0xff] %vm449, %v511
      %545 = vst.msk [vmem:[%s299 + $0x78] sm:$0xff] %vm449, %v513
      %546 = vrot.lane.b32.xlu0 %v402, 96
      %v547 = vpop.permute.xlu0 %546
      %548 = vrot.lane.b32.xlu0 %v405, 96
      %v549 = vpop.permute.xlu0 %548
      %550 = vrot.lane.b32.xlu0 %v408, 96
      %v551 = vpop.permute.xlu0 %550
      %552 = vrot.lane.b32.xlu0 %v411, 96
      %v553 = vpop.permute.xlu0 %552
      %554 = vrot.lane.b32.xlu0 %v414, 96
      %v555 = vpop.permute.xlu0 %554
      %556 = vrot.lane.b32.xlu0 %v417, 96
      %v557 = vpop.permute.xlu0 %556
      %558 = vrot.lane.b32.xlu0 %v420, 96
      %v559 = vpop.permute.xlu0 %558
      %560 = vrot.lane.b32.xlu0 %v423, 96
      %v561 = vpop.permute.xlu0 %560
      %562 = vrot.lane.b32.xlu0 %v426, 96
      %v563 = vpop.permute.xlu0 %562
      %564 = vrot.lane.b32.xlu0 %v429, 96
      %v565 = vpop.permute.xlu0 %564
      %566 = vrot.lane.b32.xlu0 %v432, 96
      %v567 = vpop.permute.xlu0 %566
      %568 = vrot.lane.b32.xlu0 %v435, 96
      %v569 = vpop.permute.xlu0 %568
      %570 = vrot.lane.b32.xlu0 %v438, 96
      %v571 = vpop.permute.xlu0 %570
      %572 = vrot.lane.b32.xlu0 %v441, 96
      %v573 = vpop.permute.xlu0 %572
      %574 = vrot.lane.b32.xlu0 %v444, 96
      %v575 = vpop.permute.xlu0 %574
      %576 = vrot.lane.b32.xlu0 %v447, 96
      %v577 = vpop.permute.xlu0 %576
      %594 = vst.msk [vmem:[%s309] sm:$0xff] %vm449, %v547
      %595 = vst.msk [vmem:[%s309 + $0x8] sm:$0xff] %vm449, %v549
      %596 = vst.msk [vmem:[%s309 + $0x10] sm:$0xff] %vm449, %v551
      %597 = vst.msk [vmem:[%s309 + $0x18] sm:$0xff] %vm449, %v553
      %598 = vst.msk [vmem:[%s309 + $0x20] sm:$0xff] %vm449, %v555
      %599 = vst.msk [vmem:[%s309 + $0x28] sm:$0xff] %vm449, %v557
      %600 = vst.msk [vmem:[%s309 + $0x30] sm:$0xff] %vm449, %v559
      %601 = vst.msk [vmem:[%s309 + $0x38] sm:$0xff] %vm449, %v561
      %602 = vst.msk [vmem:[%s309 + $0x40] sm:$0xff] %vm449, %v563
      %603 = vst.msk [vmem:[%s309 + $0x48] sm:$0xff] %vm449, %v565
      %604 = vst.msk [vmem:[%s309 + $0x50] sm:$0xff] %vm449, %v567
      %605 = vst.msk [vmem:[%s309 + $0x58] sm:$0xff] %vm449, %v569
      %606 = vst.msk [vmem:[%s309 + $0x60] sm:$0xff] %vm449, %v571
      %607 = vst.msk [vmem:[%s309 + $0x68] sm:$0xff] %vm449, %v573
      %608 = vst.msk [vmem:[%s309 + $0x70] sm:$0xff] %vm449, %v575
      %609 = vst.msk [vmem:[%s309 + $0x78] sm:$0xff] %vm449, %v577
      %s610 = smul.u32 16, %s22
      %p611 = scmp.lt.s32.totalorder %s21, 1
      %s612 = scalar_select %p611, %s21, 1
      %p613 = scmp.lt.s32.totalorder %s610, 31
      %s614 = scalar_select %p613, %s610, 31
      %s615 = smul.addr %s612, 32
      %s616 = sadd.s32 %s614, %s615
      %s617 = smul.addr %s616, 8
      %s618 = scalar_lea.vmem %s3, %s617
      %s619 = smul.u32 16, %s22
      %p620 = scmp.lt.s32.totalorder %s21, 1
      %s621 = scalar_select %p620, %s21, 1
      %p622 = scmp.lt.s32.totalorder %s619, 31
      %s623 = scalar_select %p622, %s619, 31
      %s624 = smul.addr %s621, 32
      %s625 = sadd.s32 %s623, %s624
      %s626 = smul.addr %s625, 8
      %s627 = scalar_lea.vmem %s4, %s626
      %s628 = smul.u32 16, %s22
      %p629 = scmp.lt.s32.totalorder %s21, 1
      %s630 = scalar_select %p629, %s21, 1
      %p631 = scmp.lt.s32.totalorder %s628, 31
      %s632 = scalar_select %p631, %s628, 31
      %s633 = smul.addr %s630, 32
      %s634 = sadd.s32 %s632, %s633
      %s635 = smul.addr %s634, 8
      %s636 = scalar_lea.vmem %s5, %s635
      // Predicated region
      $region33: #{tpu_custom_call.1} parent=31 // pred_check
        %p637 = pneg %p119
      $region34: #{tpu_custom_call.1} parent=31 // pred_check_branch
        %639 = sbr.rel (%p637) target = $region36
      $region35: #{tpu_custom_call.1} parent=31 // pred_region
        %s640 = smul.u32 16, %s22
      $region36: #{tpu_custom_call.1} parent=31 // pred_fallthru
        _
      // Predicated region
      $region37: #{tpu_custom_call.1} parent=31 // pred_check
        %p641 = pneg %p147
      $region38: #{tpu_custom_call.1} parent=31 // pred_check_branch
        %643 = sbr.rel (%p641) target = $region40
      $region39: #{tpu_custom_call.1} parent=31 // pred_region
        %s644 = smul.u32 16, %s22
      $region40: #{tpu_custom_call.1} parent=31 // pred_fallthru
        _
      // Predicated region
      $region41: #{tpu_custom_call.1} parent=31 // pred_check
        %p645 = pneg %p175
      $region42: #{tpu_custom_call.1} parent=31 // pred_check_branch
        %647 = sbr.rel (%p645) target = $region44
      $region43: #{tpu_custom_call.1} parent=31 // pred_region
        %s648 = smul.u32 16, %s22
      $region44: #{tpu_custom_call.1} parent=31 // pred_fallthru
        _
    $region32: #{tpu_custom_call.1} parent=5 // pred_fallthru
      _
    %p649 = scmp.le.s32.totalorder 2, %s12
    // Predicated region
    $region45: #{tpu_custom_call.1} parent=5 // pred_check
      %p650 = pneg %p649
    $region46: #{tpu_custom_call.1} parent=5 // pred_check_branch
      %652 = sbr.rel (%p650) target = $region48
    $region47: #{tpu_custom_call.1} parent=5 // pred_region
      %s653 = ssub.s32 %s12, 2
      // Predicated region
      $region49: #{tpu_custom_call.1} parent=47 // pred_check
        %p654 = pneg %p125
      $region50: #{tpu_custom_call.1} parent=47 // pred_check_branch
        %656 = sbr.rel (%p654) target = $region52
      $region51: #{tpu_custom_call.1} parent=47 // pred_region
        %s657 = smul.u32 16, %s24
        %p658 = scmp.lt.s32.totalorder %s23, 1
        %s659 = scalar_select %p658, %s23, 1
        %p660 = scmp.lt.s32.totalorder %s657, 31
        %s661 = scalar_select %p660, %s657, 31
        %s662 = smul.addr %s659, 32
        %s663 = sadd.s32 %s661, %s662
        %s664 = smul.addr %s663, 8
        %s665 = scalar_lea.vmem %s3, %s664
      $region52: #{tpu_custom_call.1} parent=47 // pred_fallthru
        _
      // Predicated region
      $region53: #{tpu_custom_call.1} parent=47 // pred_check
        %p666 = pneg %p153
      $region54: #{tpu_custom_call.1} parent=47 // pred_check_branch
        %668 = sbr.rel (%p666) target = $region56
      $region55: #{tpu_custom_call.1} parent=47 // pred_region
        %s669 = smul.u32 16, %s24
        %p670 = scmp.lt.s32.totalorder %s23, 1
        %s671 = scalar_select %p670, %s23, 1
        %p672 = scmp.lt.s32.totalorder %s669, 31
        %s673 = scalar_select %p672, %s669, 31
        %s674 = smul.addr %s671, 32
        %s675 = sadd.s32 %s673, %s674
        %s676 = smul.addr %s675, 8
        %s677 = scalar_lea.vmem %s4, %s676
      $region56: #{tpu_custom_call.1} parent=47 // pred_fallthru
        _
      // Predicated region
      $region57: #{tpu_custom_call.1} parent=47 // pred_check
        %p678 = pneg %p181
      $region58: #{tpu_custom_call.1} parent=47 // pred_check_branch
        %680 = sbr.rel (%p678) target = $region60
      $region59: #{tpu_custom_call.1} parent=47 // pred_region
        %s681 = smul.u32 16, %s24
        %p682 = scmp.lt.s32.totalorder %s23, 1
        %s683 = scalar_select %p682, %s23, 1
        %p684 = scmp.lt.s32.totalorder %s681, 31
        %s685 = scalar_select %p684, %s681, 31
        %s686 = smul.addr %s683, 32
        %s687 = sadd.s32 %s685, %s686
        %s688 = smul.addr %s687, 8
        %s689 = scalar_lea.vmem %s5, %s688
      $region60: #{tpu_custom_call.1} parent=47 // pred_fallthru
        _
    $region48: #{tpu_custom_call.1} parent=5 // pred_fallthru
      _
  $region6: #{tpu_custom_call.1} parent=0 // loop_footer
    %s16 = sadd.s32 1, %s12
  $region7: #{tpu_custom_call.1} parent=0 // loop_footer_branch
    %11 = sbr.rel target = $region3
  $region8: #{tpu_custom_call.1} parent=0 // loop_exit
    _

</llo_original>
